<compile_context>
chip_gen: v7x
topology: tpu7x:2x2x1
jax: 0.10.0
libtpu: 0.0.40
codegen_flags: <defaults>
</compile_context>

<pallas_src>
import functools

import jax
import jax.numpy as jnp
from jax.experimental import pallas as pl
from jax.experimental.pallas import tpu as pltpu

_LANES = 128


def _dropedge_kernel(seed_ref, vals_ref, newvals_ref, mask_ref, *,
                     threshold, inv_keep, block_elems):
    shape = vals_ref.shape                                   # (br, 128)
    # Global element index, invariant to block size / grid sharding:
    #   gid = program_id * (br*128) + row*128 + lane
    lin = (jax.lax.broadcasted_iota(jnp.int32, shape, 0) * _LANES
           + jax.lax.broadcasted_iota(jnp.int32, shape, 1)).astype(jnp.uint32)
    # Fold grid offset and seed into a single per-tile scalar (scalar unit).
    base = (pl.program_id(0).astype(jnp.uint32) * jnp.uint32(block_elems)
            + seed_ref[0].astype(jnp.uint32) * jnp.uint32(0x9E3779B1))
    x = lin + base
    # Trimmed counter hash: Weyl-style multiply spreads the counter into the
    # high bits, one xorshift-multiply-xorshift round finishes the mix.
    x = x * jnp.uint32(0x9E3779B1)
    x = x ^ (x >> 16)
    x = x * jnp.uint32(0x85EBCA6B)
    x = x ^ (x >> 13)
    # torch: keep = floor(rand + keepRate)  <=>  rand >= 1 - keepRate
    #        <=>  bits >= round((1 - keepRate) * 2**32)
    keep = x >= jnp.uint32(threshold)
    v = vals_ref[...].astype(jnp.float32)
    scaled = v * jnp.float32(inv_keep)
    newvals_ref[...] = jnp.where(keep, scaled,
                                 jnp.zeros_like(scaled)).astype(newvals_ref.dtype)
    mask_ref[...] = keep.astype(jnp.int8)


def _choose_block_rows(rows, requested):
    """Block rows: multiple of 32 (int8 sublane tile); ~2 blocks if it all fits."""
    br = max(32, (int(requested) // 32) * 32)
    if rows <= br:
        # Split into ~2 blocks so v7x's two TensorCores both get work.
        br = max(32, -(-rows // 64) * 32)
    return br


def sp_adj_drop_edge(vals, idxs, keep_rate, seed=0, block_rows=2048):
    """Returns (new_vals, idxs, keep_mask).

    new_vals[i] = vals[i] / keep_rate if edge i is kept, else 0 (input dtype).
    idxs is returned unchanged (static shapes).
    keep_mask is int8; nonzero == kept.
    """
    if keep_rate >= 1.0:
        return vals, idxs, jnp.ones(vals.shape, dtype=jnp.int8)

    nnz = vals.shape[0]
    out_dtype = vals.dtype
    rows = pl.cdiv(nnz, _LANES)

    # Zero-copy layout when the edge count is 128-aligned and big enough:
    # plain reshapes in/out, masked partial last block, no pad and no slices.
    aligned = (rows * _LANES == nnz) and rows >= 64
    if aligned:
        n_rows = rows
        br = _choose_block_rows(rows, block_rows)
        vals2d = vals.reshape(n_rows, _LANES)          # contiguous: free reshape
    else:
        # Ragged (or tiny) edge count: one pad pass + output slices.
        # TODO(synk): callers that keep edge values in a 128-aligned buffer
        # (standard for preprocessed adjacencies) hit the zero-copy path above.
        rows32 = ((rows + 31) // 32) * 32
        br = _choose_block_rows(rows32, block_rows)
        n_rows = ((rows32 + br - 1) // br) * br        # exact multiple of br
        pad = n_rows * _LANES - nnz
        vals2d = jnp.pad(vals, (0, pad)).reshape(n_rows, _LANES)

    grid = (pl.cdiv(n_rows, br),)
    seed_arr = jnp.array([seed], dtype=jnp.int32)
    # Clamping to 2**32-1 introduces at most ~2^-32 keep-probability bias.
    threshold = min(int(round((1.0 - float(keep_rate)) * 2 ** 32)), 2 ** 32 - 1)

    new2d, mask2d = pl.pallas_call(
        functools.partial(_dropedge_kernel,
                          threshold=threshold,
                          inv_keep=float(1.0 / float(keep_rate)),
                          block_elems=br * _LANES),
        out_shape=(
            jax.ShapeDtypeStruct((n_rows, _LANES), out_dtype),
            jax.ShapeDtypeStruct((n_rows, _LANES), jnp.int8),
        ),
        grid=grid,
        in_specs=[
            pl.BlockSpec(memory_space=pltpu.MemorySpace.SMEM),   # seed scalar
            pl.BlockSpec((br, _LANES), lambda i: (i, 0)),        # values tile
        ],
        out_specs=(
            pl.BlockSpec((br, _LANES), lambda i: (i, 0)),
            pl.BlockSpec((br, _LANES), lambda i: (i, 0)),
        ),
        compiler_params=pltpu.CompilerParams(
            dimension_semantics=("parallel",)),
    )(seed_arr, vals2d)

    new_vals = new2d.reshape(-1)
    keep_mask = mask2d.reshape(-1)
    if not aligned:
        new_vals = new_vals[:nnz]
        keep_mask = keep_mask[:nnz]
    # TODO(synk): torch compacts newVals/newIdxs via boolean indexing (dynamic
    # output size); not expressible with static shapes, so dropped edges are
    # zero-valued instead.
    return new_vals, idxs, keep_mask


if __name__ == "__main__":
    key = jax.random.PRNGKey(0)
    k_vals, k_rows, k_cols = jax.random.split(key, 3)

    num_nodes = 32
    nnz = 300                       # ragged: exercises the padded path
    keep_rate = 0.7

    vals = jax.random.uniform(k_vals, (nnz,), dtype=jnp.float32)
    rows = jax.random.randint(k_rows, (nnz,), 0, num_nodes, dtype=jnp.int32)
    cols = jax.random.randint(k_cols, (nnz,), 0, num_nodes, dtype=jnp.int32)
    idxs = jnp.stack([rows, cols], axis=0)  # [2, nnz] COO indices

    new_vals, new_idxs, keep_mask = sp_adj_drop_edge(vals, idxs, keep_rate, seed=0)
    jax.block_until_ready((new_vals, new_idxs, keep_mask))

    kept = keep_mask != 0
    err = jnp.abs(jnp.where(kept, new_vals * keep_rate - vals, 0.0))
    assert float(jnp.max(err)) < 1e-5
    assert bool(jnp.all(jnp.where(kept, 0.0, new_vals) == 0.0))
    frac = float(kept.astype(jnp.float32).mean())
    assert 0.45 < frac < 0.95, frac
    assert new_idxs.shape == (2, nnz)
    assert new_vals.dtype == vals.dtype and keep_mask.dtype == jnp.int8

    # keepRate == 1.0 fast path returns the adjacency unchanged (same dtypes).
    v1, i1, m1 = sp_adj_drop_edge(vals, idxs, 1.0)
    jax.block_until_ready((v1, i1, m1))
    assert bool(jnp.all(v1 == vals)) and bool(jnp.all(m1 != 0))
    assert v1.dtype == vals.dtype and m1.dtype == jnp.int8

    # 128-aligned nnz -> zero-copy path (no pad / no slice), multi-step grid
    # with a masked partial last block, and bit-identical results across block
    # sizes (counter-based PRNG is tiling-invariant).
    nnz2 = 300 * 128
    vals2 = jax.random.uniform(jax.random.PRNGKey(1), (nnz2,), dtype=jnp.float32)
    idxs2 = jnp.zeros((2, nnz2), dtype=jnp.int32)
    a_vals, _, a_mask = sp_adj_drop_edge(vals2, idxs2, 0.5, seed=3, block_rows=32)
    b_vals, _, b_mask = sp_adj_drop_edge(vals2, idxs2, 0.5, seed=3, block_rows=2048)
    jax.block_until_ready((a_vals, b_vals))
    assert bool(jnp.all(a_vals == b_vals)) and bool(jnp.all(a_mask == b_mask))
    frac2 = float((a_mask != 0).astype(jnp.float32).mean())
    assert 0.45 < frac2 < 0.55, frac2

    print("KERNEL_OK")
</pallas_src>

<mosaic_0001>
module attributes {stable_mosaic.version = 11 : i64} {
  func.func @_dropedge_kernel(%arg0: i32, %arg1: memref<1xi32, #tpu.memory_space<smem>>, %arg2: memref<32x128xf32, #tpu.memory_space<vmem>>, %arg3: memref<32x128xf32, #tpu.memory_space<vmem>>, %arg4: memref<32x128xi8, #tpu.memory_space<vmem>>) attributes {dimension_semantics = [#tpu.dimension_semantics<parallel>], iteration_bounds = array<i64: 1>, scalar_prefetch = 0 : i64, scratch_operands = 0 : i64, tpu.core_type = #tpu.core_type<tc>, window_params = [{transform_indices = @transform_0, window_bounds = array<i64: 1>}, {transform_indices = @transform_1, window_bounds = array<i64: 32, 128>}, {transform_indices = @transform_2, window_bounds = array<i64: 32, 128>}, {transform_indices = @transform_3, window_bounds = array<i64: 32, 128>}]} {
    %0 = tpu.iota {dimensions = array<i32: 0>} : vector<32x128xi32>
    %c128_i32 = arith.constant 128 : i32
    %1 = vector.broadcast %c128_i32 : i32 to vector<32x128xi32>
    %2 = arith.muli %0, %1 : vector<32x128xi32>
    %3 = tpu.iota {dimensions = array<i32: 1>} : vector<32x128xi32>
    %4 = arith.addi %2, %3 : vector<32x128xi32>
    %c4096_i32 = arith.constant 4096 : i32
    %5 = arith.muli %arg0, %c4096_i32 : i32
    %c0 = arith.constant 0 : index
    %6 = memref.load %arg1[%c0] : memref<1xi32, #tpu.memory_space<smem>>
    %c-1640531535_i32 = arith.constant -1640531535 : i32
    %7 = arith.muli %6, %c-1640531535_i32 : i32
    %8 = arith.addi %5, %7 : i32
    %9 = vector.broadcast %8 : i32 to vector<32x128xi32>
    %10 = arith.addi %4, %9 : vector<32x128xi32>
    %c-1640531535_i32_0 = arith.constant -1640531535 : i32
    %11 = vector.broadcast %c-1640531535_i32_0 : i32 to vector<32x128xi32>
    %12 = arith.muli %10, %11 : vector<32x128xi32>
    %c16_i32 = arith.constant 16 : i32
    %13 = vector.broadcast %c16_i32 : i32 to vector<32x128xi32>
    %14 = arith.shrui %12, %13 : vector<32x128xi32>
    %15 = arith.xori %12, %14 : vector<32x128xi32>
    %c-2048144789_i32 = arith.constant -2048144789 : i32
    %16 = vector.broadcast %c-2048144789_i32 : i32 to vector<32x128xi32>
    %17 = arith.muli %15, %16 : vector<32x128xi32>
    %c13_i32 = arith.constant 13 : i32
    %18 = vector.broadcast %c13_i32 : i32 to vector<32x128xi32>
    %19 = arith.shrui %17, %18 : vector<32x128xi32>
    %20 = arith.xori %17, %19 : vector<32x128xi32>
    %c1288490189_i32 = arith.constant 1288490189 : i32
    %21 = vector.broadcast %c1288490189_i32 : i32 to vector<32x128xi32>
    %22 = arith.cmpi uge, %20, %21 : vector<32x128xi32>
    %c0_1 = arith.constant 0 : index
    %c0_2 = arith.constant 0 : index
    %23 = vector.load %arg2[%c0_1, %c0_2] : memref<32x128xf32, #tpu.memory_space<vmem>>, vector<32x128xf32>
    %cst = arith.constant 1.42857146 : f32
    %24 = vector.broadcast %cst : f32 to vector<32x128xf32>
    %25 = arith.mulf %23, %24 : vector<32x128xf32>
    %cst_3 = arith.constant 0.000000e+00 : f32
    %26 = vector.broadcast %cst_3 : f32 to vector<32x128xf32>
    %27 = arith.select %22, %25, %26 : vector<32x128xi1>, vector<32x128xf32>
    %c0_4 = arith.constant 0 : index
    %c0_5 = arith.constant 0 : index
    %28 = vector.load %arg3[%c0_4, %c0_5] : memref<32x128xf32, #tpu.memory_space<vmem>>, vector<32x128xf32>
    tpu.vector_store %arg3[%c0_4, %c0_5], %27 {strides = array<i32>} : memref<32x128xf32, #tpu.memory_space<vmem>>, vector<32x128xf32>,
    %29 = arith.extui %22 : vector<32x128xi1> to vector<32x128xi8>
    %c0_6 = arith.constant 0 : index
    %c0_7 = arith.constant 0 : index
    %30 = vector.load %arg4[%c0_6, %c0_7] : memref<32x128xi8, #tpu.memory_space<vmem>>, vector<32x128xi8>
    tpu.vector_store %arg4[%c0_6, %c0_7], %29 {strides = array<i32>} : memref<32x128xi8, #tpu.memory_space<vmem>>, vector<32x128xi8>,
    return
  }
  func.func @transform_0(%arg0: i32) -> i32 {
    %c0_i32 = arith.constant 0 : i32
    %c0_i32_0 = arith.constant 0 : i32
    return %c0_i32 : i32
  }
  func.func @transform_1(%arg0: i32) -> (i32, i32) {
    %c0_i32 = arith.constant 0 : i32
    %c0_i32_0 = arith.constant 0 : i32
    return %arg0, %c0_i32 : i32, i32
  }
  func.func @transform_2(%arg0: i32) -> (i32, i32) {
    %c0_i32 = arith.constant 0 : i32
    %c0_i32_0 = arith.constant 0 : i32
    return %arg0, %c0_i32 : i32, i32
  }
  func.func @transform_3(%arg0: i32) -> (i32, i32) {
    %c0_i32 = arith.constant 0 : i32
    %c0_i32_0 = arith.constant 0 : i32
    return %arg0, %c0_i32 : i32, i32
  }
}

</mosaic_0001>

<llo_original>
// kernel: tpu_custom_call.1
$region0: #{tpu_custom_call.1}
  #allocation0 [shape = 'u32[]', space=smem, size = 0x4, offset = 0x4, fixed_abs, tag = 'smem constant byte address 0x4 - core index']
  #allocation1 [shape = 'u32[144,128]{1,0:T(1,128)}', space=vmem, size = 0x12000, scoped, tag = 'internal scratch']
  #allocation2 [shape = 's32[1]{0:T(128)S(6)}', space=smem, size = 0x200, scoped, tag = 'scoped memory for tpu_custom_call.1']
  %s0 = inlined_call_operand.<no memory space> [shape: s32[1], index: 0, kind: input, shape index: {}]
  %s1 = inlined_call_operand.hbm [shape: f32[32,128], index: 1, kind: input, shape index: {}]
  %s2 = inlined_call_operand.hbm [shape: f32[32,128], index: 2, kind: output, shape index: {0}]
  %s3 = inlined_call_operand.hbm [shape: s8[32,128], index: 3, kind: output, shape index: {1}]
  %4 = xla_tuple %s2, %s3
  %s5 = sld [smem:[#allocation0]]
  $region30: #{tpu_custom_call.1} parent=0
    _
  %s7 = ssub.s32 1, %s5
  %s8 = scalar_select 0, %s7, %s5
  %9 = sst [smem:[#allocation2]] %s0
  $region1: #{tpu_custom_call.1} parent=0
    #allocation3 [shape = 'u8[16384]{0}', space=vmem, size = 0x4000, scoped, tag = 'input window, operand 1, single buffered']
    #allocation4 [shape = 's32[1]{0}', space=sflag, size = 0x4, scoped, tag = 'scoped memory for tpu_custom_call.1']
    #allocation5 [shape = 's32[1]{0}', space=sflag, size = 0x4, scoped, tag = 'scoped memory for tpu_custom_call.1']
    #allocation6 [shape = 'u8[16384]{0}', space=vmem, size = 0x4000, scoped, tag = 'output window, operand 0, single buffered']
    #allocation7 [shape = 'u8[4096]{0}', space=vmem, size = 0x1000, scoped, tag = 'output window, operand 1, single buffered']
    #allocation8 [shape = 's32[1]{0}', space=sflag, size = 0x4, scoped, tag = 'scoped memory for tpu_custom_call.1']
    %10 = vsyncpa [#allocation4], 0
    %11 = vsyncpa [#allocation5], 0
    %12 = vsyncpa [#allocation8], 0
    // Predicated region
    $region2: #{tpu_custom_call.1} parent=1 // pred_check
      _
    $region3: #{tpu_custom_call.1} parent=1 // pred_check_branch
      %14 = sbr.rel (0) target = $region5
    $region4: #{tpu_custom_call.1} parent=1 // pred_region
      _
    $region5: #{tpu_custom_call.1} parent=1 // pred_fallthru
      _
    // Predicated region
    $region6: #{tpu_custom_call.1} parent=1 // pred_check
      _
    $region7: #{tpu_custom_call.1} parent=1 // pred_check_branch
      %16 = sbr.rel (0) target = $region9
    $region8: #{tpu_custom_call.1} parent=1 // pred_region
      %s18 = ssub.s32 512, 512
      %19 = vsyncadd [#allocation4], %s18
      %s20 = sshll.u32 [#allocation3], 4
      %s21 = int_to_ptr.vmem [resolvable:$true] %s20
      %26 = dma.hbm_to_vmem [thread:$0]  %s1, 512, %s21, [#allocation4], 128, 128, 8
    $region9: #{tpu_custom_call.1} parent=1 // pred_fallthru
      _
    // Predicated region
    $region10: #{tpu_custom_call.1} parent=1 // pred_check
      _
    $region11: #{tpu_custom_call.1} parent=1 // pred_check_branch
      %28 = sbr.rel (0) target = $region13
    $region12: #{tpu_custom_call.1} parent=1 // pred_region
      %29 = dma.done [#allocation4], 512
    $region13: #{tpu_custom_call.1} parent=1 // pred_fallthru
      _
    %v32 = vlaneseq
    %v33 = vshrl.u32 %v32, 7
    %v34 = vadd.s32 %v33, 8
    %v35 = vadd.s32 %v33, 16
    %v36 = vadd.s32 %v33, 24
    %v37 = vmul.u32 %v33, 128
    %v38 = vmul.u32 %v34, 128
    %v39 = vmul.u32 %v35, 128
    %v40 = vmul.u32 %v36, 128
    %v41 = vlaneseq
    %v42 = vand.u32 %v41, 127
    %v43 = vadd.s32 %v37, %v42
    %v44 = vadd.s32 %v38, %v42
    %v45 = vadd.s32 %v39, %v42
    %v46 = vadd.s32 %v40, %v42
    %s47 = smul.u32 0, 4096
    %s48 = sld [smem:[#allocation2]]
    %s49 = smul.u32 %s48, 2654435761
    %s50 = sadd.s32 %s47, %s49
    %v51 = vstv %s50
    %v52 = vadd.s32 %v43, %v51
    %v53 = vadd.s32 %v44, %v51
    %v54 = vadd.s32 %v45, %v51
    %v55 = vadd.s32 %v46, %v51
    %v56 = vmul.u32 %v52, 2654435761
    %v57 = vmul.u32 %v53, 2654435761
    %v58 = vmul.u32 %v54, 2654435761
    %v59 = vmul.u32 %v55, 2654435761
    %v60 = vshrl.u32 %v56, 16
    %v61 = vshrl.u32 %v57, 16
    %v62 = vshrl.u32 %v58, 16
    %v63 = vshrl.u32 %v59, 16
    %v64 = vxor.u32 %v56, %v60
    %v65 = vxor.u32 %v57, %v61
    %v66 = vxor.u32 %v58, %v62
    %v67 = vxor.u32 %v59, %v63
    %v68 = vmul.u32 %v64, 2246822507
    %v69 = vmul.u32 %v65, 2246822507
    %v70 = vmul.u32 %v66, 2246822507
    %v71 = vmul.u32 %v67, 2246822507
    %v72 = vshrl.u32 %v68, 13
    %v73 = vshrl.u32 %v69, 13
    %v74 = vshrl.u32 %v70, 13
    %v75 = vshrl.u32 %v71, 13
    %v76 = vxor.u32 %v68, %v72
    %v77 = vxor.u32 %v69, %v73
    %v78 = vxor.u32 %v70, %v74
    %v79 = vxor.u32 %v71, %v75
    %vm80 = vcmp.ge.u32.totalorder %v76, 1288490189
    %vm81 = vcmp.ge.u32.totalorder %v77, 1288490189
    %vm82 = vcmp.ge.u32.totalorder %v78, 1288490189
    %vm83 = vcmp.ge.u32.totalorder %v79, 1288490189
    %v84 = vld [vmem:[#allocation3] sm:$0xff]
    %v85 = vld [vmem:[#allocation3 + $0x8] sm:$0xff]
    %v86 = vld [vmem:[#allocation3 + $0x10] sm:$0xff]
    %v87 = vld [vmem:[#allocation3 + $0x18] sm:$0xff]
    %v88 = vmul.f32 %v84, 1.4285715
    %v89 = vmul.f32 %v85, 1.4285715
    %v90 = vmul.f32 %v86, 1.4285715
    %v91 = vmul.f32 %v87, 1.4285715
    %v92 = vsel %vm80, %v88, 0.0
    %v93 = vsel %vm81, %v89, 0.0
    %v94 = vsel %vm82, %v90, 0.0
    %v95 = vsel %vm83, %v91, 0.0
    %96 = vst [vmem:[#allocation6] sm:$0xff] %v92
    %97 = vst [vmem:[#allocation6 + $0x8] sm:$0xff] %v93
    %98 = vst [vmem:[#allocation6 + $0x10] sm:$0xff] %v94
    %99 = vst [vmem:[#allocation6 + $0x18] sm:$0xff] %v95
    %vm100 = vmpackc.low %vm81, %vm80
    %vm101 = vmpackc.low %vm83, %vm82
    %vm102 = vmpackc.even %vm101, %vm100
    %v103 = vsel %vm102, 16843009, 0
    %104 = vst [vmem:[#allocation7] sm:$0xff] %v103
    // Predicated region
    $region14: #{tpu_custom_call.1} parent=1 // pred_check
      _
    $region15: #{tpu_custom_call.1} parent=1 // pred_check_branch
      %106 = sbr.rel (0) target = $region17
    $region16: #{tpu_custom_call.1} parent=1 // pred_region
      %s108 = ssub.s32 512, 512
      %109 = vsyncadd [#allocation5], %s108
      %s110 = sshll.u32 [#allocation6], 4
      %s111 = int_to_ptr.vmem [resolvable:$true] %s110
      %116 = dma.vmem_to_hbm [thread:$0]  %s111, 512, %s2, [#allocation5], 128, 128, 8
    $region17: #{tpu_custom_call.1} parent=1 // pred_fallthru
      _
    // Predicated region
    $region18: #{tpu_custom_call.1} parent=1 // pred_check
      _
    $region19: #{tpu_custom_call.1} parent=1 // pred_check_branch
      %118 = sbr.rel (0) target = $region21
    $region20: #{tpu_custom_call.1} parent=1 // pred_region
      %s120 = ssub.s32 128, 128
      %121 = vsyncadd [#allocation8], %s120
      %s123 = sshll.u32 [#allocation7], 4
      %s124 = int_to_ptr.vmem [resolvable:$true] %s123
      %126 = dma.vmem_to_hbm [thread:$0]  %s124, 128, %s3, [#allocation8]
    $region21: #{tpu_custom_call.1} parent=1 // pred_fallthru
      _
    // Predicated region
    $region22: #{tpu_custom_call.1} parent=1 // pred_check
      _
    $region23: #{tpu_custom_call.1} parent=1 // pred_check_branch
      %128 = sbr.rel (0) target = $region25
    $region24: #{tpu_custom_call.1} parent=1 // pred_region
      %129 = dma.done [#allocation5], 512
    $region25: #{tpu_custom_call.1} parent=1 // pred_fallthru
      _
    // Predicated region
    $region26: #{tpu_custom_call.1} parent=1 // pred_check
      _
    $region27: #{tpu_custom_call.1} parent=1 // pred_check_branch
      %131 = sbr.rel (0) target = $region29
    $region28: #{tpu_custom_call.1} parent=1 // pred_region
      %132 = dma.done [#allocation8], 128
    $region29: #{tpu_custom_call.1} parent=1 // pred_fallthru
      _
    %133 = vsyncpa [#allocation4], 1
    %134 = vsyncpa [#allocation5], 1
    %135 = vsyncpa [#allocation8], 1

</llo_original>
